<compile_context>
chip_gen: v7x
topology: tpu7x:2x2x1
jax: 0.10.0
libtpu: 0.0.40
codegen_flags: <defaults>
</compile_context>

<pallas_src>
import math

import jax
import jax.numpy as jnp
from jax.experimental import pallas as pl
from jax.experimental.pallas import tpu as pltpu

_INV_SQRT2 = 0.7071067811865476  # 1/sqrt(2) as a multiply (no divide)


def _gelu_exact(x):
    # Exact (erf-based) GELU, matching BERT's ACT2FN["gelu"].
    return 0.5 * x * (1.0 + jax.lax.erf(x * _INV_SQRT2))


def _fused_kernel(x_ref, w_ref, b_ref, o_ref):
    # x_ref: (tm, H), w_ref: (H, tn), b_ref: (1, tn) f32, o_ref: (tm, tn)
    acc = jnp.dot(x_ref[...], w_ref[...], preferred_element_type=jnp.float32)
    acc = acc + b_ref[...]  # bias is f32, broadcasts over rows
    o_ref[...] = _gelu_exact(acc).astype(o_ref.dtype)


def _ksplit_kernel(x_ref, w_ref, b_ref, o_ref, acc_ref):
    # Contraction split across the trailing grid axis; f32 VMEM accumulator.
    k = pl.program_id(2)

    @pl.when(k == 0)
    def _():
        acc_ref[...] = jnp.zeros_like(acc_ref)

    acc_ref[...] += jnp.dot(x_ref[...], w_ref[...],
                            preferred_element_type=jnp.float32)

    @pl.when(k == pl.num_programs(2) - 1)
    def _():
        acc = acc_ref[...] + b_ref[...]
        o_ref[...] = _gelu_exact(acc).astype(o_ref.dtype)


def _round_up(a, b):
    return (a + b - 1) // b * b


def bert_intermediate(hidden_states, weight, bias, *, tm=512, tn=512, tk=2048,
                      compute_dtype=None):
    """hidden_states: (B, S, H); weight: (H, I); bias: (I,) -> (B, S, I).

    compute_dtype: optional dtype (e.g. jnp.bfloat16) for the MXU operands;
    accumulation stays f32 and the output keeps hidden_states' dtype.
    """
    B, S, H = hidden_states.shape
    H_w, I = weight.shape
    assert H_w == H, "weight must be (hidden_size, intermediate_size)"
    out_dtype = hidden_states.dtype
    M = B * S

    x2d = hidden_states.reshape(M, H)
    w2d = weight
    if compute_dtype is not None:
        x2d = x2d.astype(compute_dtype)
        w2d = w2d.astype(compute_dtype)
    b2d = bias.reshape(1, I).astype(jnp.float32)

    in_isz = jnp.dtype(x2d.dtype).itemsize
    out_isz = jnp.dtype(out_dtype).itemsize

    # Effective tile sizes: capped by the (padded) problem, (8,128)-aligned.
    tm_eff = _round_up(min(tm, _round_up(M, 8)), 8)
    tn_eff = _round_up(min(tn, _round_up(I, 128)), 128)
    tk_eff = _round_up(min(tk, _round_up(H, 128)), 128)

    # Double-buffered x/W/bias/out tiles + (worst case) f32 accumulator.
    def tiles_bytes(tm_, tn_, tk_):
        return (2 * (tm_ * tk_ * in_isz + tk_ * tn_ * in_isz + tn_ * 4
                     + tm_ * tn_ * out_isz) + tm_ * tn_ * 4)

    # Keep the working set well inside VMEM on every generation (v7x: 64 MiB).
    budget_cap = 44 << 20
    while tiles_bytes(tm_eff, tn_eff, tk_eff) > budget_cap and tk_eff > 512:
        tk_eff = max(512, tk_eff // 2)
    while tiles_bytes(tm_eff, tn_eff, tk_eff) > budget_cap and tn_eff > 256:
        tn_eff = max(256, tn_eff // 2)
    while tiles_bytes(tm_eff, tn_eff, tk_eff) > budget_cap and tm_eff > 256:
        tm_eff = max(256, tm_eff // 2)

    # Pad so the grid tiles evenly (zero padding along H is math-neutral).
    M_pad = _round_up(M, tm_eff)
    I_pad = _round_up(I, tn_eff)
    H_pad = _round_up(H, tk_eff)
    if M_pad != M or H_pad != H:
        x2d = jnp.pad(x2d, ((0, M_pad - M), (0, H_pad - H)))
    if H_pad != H or I_pad != I:
        w2d = jnp.pad(w2d, ((0, H_pad - H), (0, I_pad - I)))
    if I_pad != I:
        b2d = jnp.pad(b2d, ((0, 0), (0, I_pad - I)))

    gM = M_pad // tm_eff
    gN = I_pad // tn_eff
    gK = H_pad // tk_eff

    vmem_budget = tiles_bytes(tm_eff, tn_eff, tk_eff)
    vmem_limit = int(min(max(32 << 20, vmem_budget + (4 << 20)), 64 << 20))

    if gK == 1:
        # Whole contraction in one block: pick the grid order that keeps the
        # more expensive operand resident across the inner loop.
        x_bytes = M_pad * H_pad * in_isz
        w_bytes = H_pad * I_pad * in_isz
        rows_outer = (x_bytes + gM * w_bytes) <= (gN * x_bytes + w_bytes)
        if rows_outer:
            grid = (gM, gN)
            x_spec = pl.BlockSpec((tm_eff, H_pad), lambda i, j: (i, 0))
            w_spec = pl.BlockSpec((H_pad, tn_eff), lambda i, j: (0, j))
            b_spec = pl.BlockSpec((1, tn_eff), lambda i, j: (0, j))
            o_spec = pl.BlockSpec((tm_eff, tn_eff), lambda i, j: (i, j))
        else:
            grid = (gN, gM)
            x_spec = pl.BlockSpec((tm_eff, H_pad), lambda j, i: (i, 0))
            w_spec = pl.BlockSpec((H_pad, tn_eff), lambda j, i: (0, j))
            b_spec = pl.BlockSpec((1, tn_eff), lambda j, i: (0, j))
            o_spec = pl.BlockSpec((tm_eff, tn_eff), lambda j, i: (i, j))
        kernel = _fused_kernel
        scratch = []
        dim_sem = ("parallel", "parallel")
    else:
        # K-split path: reduction axis last, output tile resident across it.
        grid = (gM, gN, gK)
        x_spec = pl.BlockSpec((tm_eff, tk_eff), lambda i, j, k: (i, k))
        w_spec = pl.BlockSpec((tk_eff, tn_eff), lambda i, j, k: (k, j))
        b_spec = pl.BlockSpec((1, tn_eff), lambda i, j, k: (0, j))
        o_spec = pl.BlockSpec((tm_eff, tn_eff), lambda i, j, k: (i, j))
        kernel = _ksplit_kernel
        scratch = [pltpu.VMEM((tm_eff, tn_eff), jnp.float32)]
        dim_sem = ("parallel", "parallel", "arbitrary")

    out2d = pl.pallas_call(
        kernel,
        out_shape=jax.ShapeDtypeStruct((M_pad, I_pad), out_dtype),
        grid_spec=pltpu.PrefetchScalarGridSpec(
            num_scalar_prefetch=0,
            grid=grid,
            in_specs=[x_spec, w_spec, b_spec],
            out_specs=o_spec,
            scratch_shapes=scratch,
        ),
        compiler_params=pltpu.CompilerParams(
            dimension_semantics=dim_sem,
            vmem_limit_bytes=vmem_limit,
        ),
    )(x2d, w2d, b2d)

    if M_pad != M or I_pad != I:
        out2d = out2d[:M, :I]
    return out2d.reshape(B, S, I)


if __name__ == "__main__":
    # Small BERT-like config.
    batch, seq, hidden_size, intermediate_size = 2, 8, 32, 128

    key = jax.random.PRNGKey(0)
    k_x, k_w, k_b = jax.random.split(key, 3)

    x = jax.random.normal(k_x, (batch, seq, hidden_size), dtype=jnp.float32)
    # PyTorch nn.Linear stores weight as (I, H); we keep the math-equivalent (H, I).
    w = jax.random.normal(k_w, (hidden_size, intermediate_size),
                          dtype=jnp.float32) * (1.0 / math.sqrt(hidden_size))
    b = jax.random.normal(k_b, (intermediate_size,), dtype=jnp.float32) * 0.02

    ref = jax.nn.gelu(x @ w + b, approximate=False)

    # 1) Full f32 path (fused, single-K kernel).
    out = bert_intermediate(x, w, b)
    jax.block_until_ready(out)
    assert out.shape == (batch, seq, intermediate_size)
    assert jnp.allclose(out, ref, atol=1e-5, rtol=1e-5)

    # 2) Mixed precision: bf16 MXU operands, f32 accumulation and output.
    out_bf = bert_intermediate(x, w, b, compute_dtype=jnp.bfloat16)
    jax.block_until_ready(out_bf)
    assert jnp.allclose(out_bf, ref, atol=5e-2, rtol=5e-2)

    # 3) Ragged (non-tile-divisible) shape exercises the padding path.
    x3 = jax.random.normal(k_x, (3, 7, hidden_size), dtype=jnp.float32)
    out3 = bert_intermediate(x3, w, b)
    jax.block_until_ready(out3)
    ref3 = jax.nn.gelu(x3 @ w + b, approximate=False)
    assert jnp.allclose(out3, ref3, atol=1e-5, rtol=1e-5)

    # 4) K-split accumulator path (forced tiny tk).
    out4 = bert_intermediate(x, w, b, tk=128)
    jax.block_until_ready(out4)
    assert jnp.allclose(out4, ref, atol=1e-5, rtol=1e-5)

    print("KERNEL_OK")
</pallas_src>

<mosaic_0001>
module attributes {stable_mosaic.version = 11 : i64} {
  func.func @_fused_kernel(%arg0: i32, %arg1: i32, %arg2: memref<16x128xf32, #tpu.memory_space<vmem>>, %arg3: memref<128x128xf32, #tpu.memory_space<vmem>>, %arg4: memref<1x128xf32, #tpu.memory_space<vmem>>, %arg5: memref<16x128xf32, #tpu.memory_space<vmem>>) attributes {dimension_semantics = [#tpu.dimension_semantics<parallel>, #tpu.dimension_semantics<parallel>], iteration_bounds = array<i64: 1, 1>, scalar_prefetch = 0 : i64, scratch_operands = 0 : i64, tpu.core_type = #tpu.core_type<tc>, window_params = [{transform_indices = @transform_0, window_bounds = array<i64: 16, 128>}, {transform_indices = @transform_1, window_bounds = array<i64: 128, 128>}, {transform_indices = @transform_2, window_bounds = array<i64: 1, 128>}, {transform_indices = @transform_3, window_bounds = array<i64: 16, 128>}]} {
    %c0 = arith.constant 0 : index
    %c0_0 = arith.constant 0 : index
    %0 = vector.load %arg2[%c0, %c0_0] : memref<16x128xf32, #tpu.memory_space<vmem>>, vector<16x128xf32>
    %c0_1 = arith.constant 0 : index
    %c0_2 = arith.constant 0 : index
    %1 = vector.load %arg3[%c0_1, %c0_2] : memref<128x128xf32, #tpu.memory_space<vmem>>, vector<128x128xf32>
    %cst = arith.constant dense<0.000000e+00> : vector<16x128xf32>
    %2 = tpu.matmul %0, %1, %cst {dimension_numbers = #tpu.dot_dimension_numbers<[1], [0], [0], [1], [0, 0, 1, 1], [], []>} : vector<16x128xf32>, vector<128x128xf32>, vector<16x128xf32> -> vector<16x128xf32>
    %c0_3 = arith.constant 0 : index
    %c0_4 = arith.constant 0 : index
    %3 = vector.load %arg4[%c0_3, %c0_4] : memref<1x128xf32, #tpu.memory_space<vmem>>, vector<1x128xf32>
    %4 = vector.broadcast %3 : vector<1x128xf32> to vector<16x128xf32>
    %5 = arith.addf %2, %4 : vector<16x128xf32>
    %cst_5 = arith.constant 5.000000e-01 : f32
    %6 = vector.broadcast %cst_5 : f32 to vector<16x128xf32>
    %7 = arith.mulf %6, %5 : vector<16x128xf32>
    %cst_6 = arith.constant 0.707106769 : f32
    %8 = vector.broadcast %cst_6 : f32 to vector<16x128xf32>
    %9 = arith.mulf %5, %8 : vector<16x128xf32>
    %10 = math.erf %9 : vector<16x128xf32>
    %cst_7 = arith.constant 1.000000e+00 : f32
    %11 = vector.broadcast %cst_7 : f32 to vector<16x128xf32>
    %12 = arith.addf %11, %10 : vector<16x128xf32>
    %13 = arith.mulf %7, %12 : vector<16x128xf32>
    %c0_8 = arith.constant 0 : index
    %c0_9 = arith.constant 0 : index
    %14 = vector.load %arg5[%c0_8, %c0_9] : memref<16x128xf32, #tpu.memory_space<vmem>>, vector<16x128xf32>
    tpu.vector_store %arg5[%c0_8, %c0_9], %13 {strides = array<i32>} : memref<16x128xf32, #tpu.memory_space<vmem>>, vector<16x128xf32>,
    return
  }
  func.func @transform_0(%arg0: i32, %arg1: i32) -> (i32, i32) {
    %c0_i32 = arith.constant 0 : i32
    %c0_i32_0 = arith.constant 0 : i32
    return %arg0, %c0_i32 : i32, i32
  }
  func.func @transform_1(%arg0: i32, %arg1: i32) -> (i32, i32) {
    %c0_i32 = arith.constant 0 : i32
    %c0_i32_0 = arith.constant 0 : i32
    return %c0_i32, %arg1 : i32, i32
  }
  func.func @transform_2(%arg0: i32, %arg1: i32) -> (i32, i32) {
    %c0_i32 = arith.constant 0 : i32
    %c0_i32_0 = arith.constant 0 : i32
    return %c0_i32, %arg1 : i32, i32
  }
  func.func @transform_3(%arg0: i32, %arg1: i32) -> (i32, i32) {
    %c0_i32 = arith.constant 0 : i32
    return %arg0, %arg1 : i32, i32
  }
}

</mosaic_0001>

<llo_original>
// kernel: tpu_custom_call.1
$region0: #{tpu_custom_call.1}
  #allocation0 [shape = 'u32[]', space=smem, size = 0x4, offset = 0x4, fixed_abs, tag = 'smem constant byte address 0x4 - core index']
  #allocation1 [shape = 'u32[144,128]{1,0:T(1,128)}', space=vmem, size = 0x12000, scoped, tag = 'internal scratch']
  %s0 = inlined_call_operand.hbm [shape: f32[16,128], index: 0, kind: input, shape index: {}]
  %s1 = inlined_call_operand.hbm [shape: f32[128,128], index: 1, kind: input, shape index: {}]
  %s2 = inlined_call_operand.vmem [shape: f32[1,128], index: 2, kind: input, shape index: {}]
  %s3 = inlined_call_operand.hbm [shape: f32[16,128], index: 3, kind: output, shape index: {}]
  %s4 = sld [smem:[#allocation0]]
  $region30: #{tpu_custom_call.1} parent=0
    _
  %s6 = ssub.s32 1, %s4
  %s7 = scalar_select 0, %s6, %s4
  $region1: #{tpu_custom_call.1} parent=0
    #allocation2 [shape = 'u8[8192]{0}', space=vmem, size = 0x2000, scoped, tag = 'input window, operand 0, single buffered']
    #allocation3 [shape = 's32[1]{0}', space=sflag, size = 0x4, scoped, tag = 'scoped memory for tpu_custom_call.1']
    #allocation4 [shape = 's32[1]{0}', space=sflag, size = 0x4, scoped, tag = 'scoped memory for tpu_custom_call.1']
    #allocation5 [shape = 'u8[65536]{0}', space=vmem, size = 0x10000, scoped, tag = 'input window, operand 1, single buffered']
    #allocation6 [shape = 's32[1]{0}', space=sflag, size = 0x4, scoped, tag = 'scoped memory for tpu_custom_call.1']
    #allocation7 [shape = 'u8[8192]{0}', space=vmem, size = 0x2000, scoped, tag = 'output window, operand 0, single buffered']
    %8 = vsyncpa [#allocation3], 0
    %9 = vsyncpa [#allocation6], 0
    %10 = vsyncpa [#allocation4], 0
    // Predicated region
    $region2: #{tpu_custom_call.1} parent=1 // pred_check
      _
    $region3: #{tpu_custom_call.1} parent=1 // pred_check_branch
      %12 = sbr.rel (0) target = $region5
    $region4: #{tpu_custom_call.1} parent=1 // pred_region
      %s14 = ssub.s32 256, 256
      %15 = vsyncadd [#allocation3], %s14
      %s16 = sshll.u32 [#allocation2], 4
      %s17 = int_to_ptr.vmem [resolvable:$true] %s16
      %22 = dma.hbm_to_vmem [thread:$0]  %s0, 256, %s17, [#allocation3], 128, 128, 8
    $region5: #{tpu_custom_call.1} parent=1 // pred_fallthru
      _
    // Predicated region
    $region6: #{tpu_custom_call.1} parent=1 // pred_check
      _
    $region7: #{tpu_custom_call.1} parent=1 // pred_check_branch
      %24 = sbr.rel (0) target = $region9
    $region8: #{tpu_custom_call.1} parent=1 // pred_region
      %s26 = ssub.s32 2048, 2048
      %27 = vsyncadd [#allocation6], %s26
      %s28 = sshll.u32 [#allocation5], 4
      %s29 = int_to_ptr.vmem [resolvable:$true] %s28
      %34 = dma.hbm_to_vmem [thread:$0]  %s1, 2048, %s29, [#allocation6], 128, 128, 8
    $region9: #{tpu_custom_call.1} parent=1 // pred_fallthru
      _
    // Predicated region
    $region10: #{tpu_custom_call.1} parent=1 // pred_check
      _
    $region11: #{tpu_custom_call.1} parent=1 // pred_check_branch
      %36 = sbr.rel (0) target = $region13
    $region12: #{tpu_custom_call.1} parent=1 // pred_region
      _
    $region13: #{tpu_custom_call.1} parent=1 // pred_fallthru
      _
    // Predicated region
    $region14: #{tpu_custom_call.1} parent=1 // pred_check
      _
    $region15: #{tpu_custom_call.1} parent=1 // pred_check_branch
      %38 = sbr.rel (0) target = $region17
    $region16: #{tpu_custom_call.1} parent=1 // pred_region
      %39 = dma.done [#allocation3], 256
    $region17: #{tpu_custom_call.1} parent=1 // pred_fallthru
      _
    // Predicated region
    $region18: #{tpu_custom_call.1} parent=1 // pred_check
      _
    $region19: #{tpu_custom_call.1} parent=1 // pred_check_branch
      %41 = sbr.rel (0) target = $region21
    $region20: #{tpu_custom_call.1} parent=1 // pred_region
      %42 = dma.done [#allocation6], 2048
    $region21: #{tpu_custom_call.1} parent=1 // pred_fallthru
      _
    %v43 = vld [vmem:[#allocation2] sm:$0xff]
    %v44 = vld [vmem:[#allocation2 + $0x8] sm:$0xff]
    %v45 = vld [vmem:[#allocation5] sm:$0xff]
    %v46 = vld [vmem:[#allocation5 + $0x8] sm:$0xff]
    %v47 = vld [vmem:[#allocation5 + $0x10] sm:$0xff]
    %v48 = vld [vmem:[#allocation5 + $0x18] sm:$0xff]
    %v49 = vld [vmem:[#allocation5 + $0x20] sm:$0xff]
    %v50 = vld [vmem:[#allocation5 + $0x28] sm:$0xff]
    %v51 = vld [vmem:[#allocation5 + $0x30] sm:$0xff]
    %v52 = vld [vmem:[#allocation5 + $0x38] sm:$0xff]
    %v53 = vld [vmem:[#allocation5 + $0x40] sm:$0xff]
    %v54 = vld [vmem:[#allocation5 + $0x48] sm:$0xff]
    %v55 = vld [vmem:[#allocation5 + $0x50] sm:$0xff]
    %v56 = vld [vmem:[#allocation5 + $0x58] sm:$0xff]
    %v57 = vld [vmem:[#allocation5 + $0x60] sm:$0xff]
    %v58 = vld [vmem:[#allocation5 + $0x68] sm:$0xff]
    %v59 = vld [vmem:[#allocation5 + $0x70] sm:$0xff]
    %v60 = vld [vmem:[#allocation5 + $0x78] sm:$0xff]
    %v61 = vld [vmem:[%s2] sm:$0x1]
    %v63 = vlaneseq
    %v64 = vshrl.u32 %v63, 7
    %v65 = vsub.s32 0, %v64
    %v66 = vrot.slane %v61, %v65
    %68 = vmatprep.subr.mxu0 0.0
    %69 = vmatpush1.msra.mxu0 %v45
    %70 = vmatprep.subr.mxu0 0.0
    %71 = vmatpush1.msra.mxu0 %v46
    %72 = vmatprep.subr.mxu0 0.0
    %73 = vmatpush1.msra.mxu0 %v47
    %74 = vmatprep.subr.mxu0 0.0
    %75 = vmatpush1.msra.mxu0 %v48
    %76 = vmatprep.subr.mxu0 0.0
    %77 = vmatpush1.msra.mxu0 %v49
    %78 = vmatprep.subr.mxu0 0.0
    %79 = vmatpush1.msra.mxu0 %v50
    %80 = vmatprep.subr.mxu0 0.0
    %81 = vmatpush1.msra.mxu0 %v51
    %82 = vmatprep.subr.mxu0 0.0
    %83 = vmatpush1.msra.mxu0 %v52
    %84 = vmatprep.subr.mxu0 0.0
    %85 = vmatpush1.msra.mxu0 %v53
    %86 = vmatprep.subr.mxu0 0.0
    %87 = vmatpush1.msra.mxu0 %v54
    %88 = vmatprep.subr.mxu0 0.0
    %89 = vmatpush1.msra.mxu0 %v55
    %90 = vmatprep.subr.mxu0 0.0
    %91 = vmatpush1.msra.mxu0 %v56
    %92 = vmatprep.subr.mxu0 0.0
    %93 = vmatpush1.msra.mxu0 %v57
    %94 = vmatprep.subr.mxu0 0.0
    %95 = vmatpush1.msra.mxu0 %v58
    %96 = vmatprep.subr.mxu0 0.0
    %97 = vmatpush1.msra.mxu0 %v59
    %98 = vmatprep.subr.mxu0 0.0
    %99 = vmatpush1.msra.mxu0 %v60
    %100 = vmatprep.subr.mxu0 0.0
    %101 = vmatpush1.msra.mxu0 0.0
    %102 = vmatprep.subr.mxu0 0.0
    %103 = vmatpush1.msra.mxu0 0.0
    %104 = vmatprep.subr.mxu0 0.0
    %105 = vmatpush1.msra.mxu0 0.0
    %106 = vmatprep.subr.mxu0 0.0
    %107 = vmatpush1.msra.mxu0 0.0
    %108 = vmatprep.subr.mxu0 0.0
    %109 = vmatpush1.msra.mxu0 0.0
    %110 = vmatprep.subr.mxu0 0.0
    %111 = vmatpush1.msra.mxu0 0.0
    %112 = vmatprep.subr.mxu0 0.0
    %113 = vmatpush1.msra.mxu0 0.0
    %114 = vmatprep.subr.mxu0 0.0
    %115 = vmatpush1.msra.mxu0 0.0
    %116 = vmatprep.subr.mxu0 0.0
    %117 = vmatpush1.msra.mxu0 0.0
    %118 = vmatprep.subr.mxu0 0.0
    %119 = vmatpush1.msra.mxu0 0.0
    %120 = vmatprep.subr.mxu0 0.0
    %121 = vmatpush1.msra.mxu0 0.0
    %122 = vmatprep.subr.mxu0 0.0
    %123 = vmatpush1.msra.mxu0 0.0
    %124 = vmatprep.subr.mxu0 0.0
    %125 = vmatpush1.msra.mxu0 0.0
    %126 = vmatprep.subr.mxu0 0.0
    %127 = vmatpush1.msra.mxu0 0.0
    %128 = vmatprep.subr.mxu0 0.0
    %129 = vmatpush1.msra.mxu0 0.0
    %130 = vmatprep.subr.mxu0 0.0
    %131 = vmatpush1.msra.mxu0 0.0
    %132 = vmatprep.mubr.f32.mxu0 0.0
    %133 = vmatmul.mubr.f32.gmra.mrb[0].mxu0 %v43
    %v134 = vpop.f32.mrb[0].mxu0
    %v135 = vadd.f32 %v66, %v134
    %v136 = vpop.f32.mrb[0].mxu0
    %137 = vmatprep.mubr.f32.mxu0 0.0
    %138 = vmatmul.mubr.f32.gmra.mrb[0].mxu0 %v44
    %v139 = vpop.f32.mrb[0].mxu0
    %v140 = vadd.f32 %v66, %v139
    %v141 = vpop.f32.mrb[0].mxu0
    %142 = vdwg.mxu0
    %v143 = vmul.f32 %v135, 0.5
    %v144 = vmul.f32 %v140, 0.5
    %v145 = vmul.f32 %v135, 0.70710677
    %v146 = vmul.f32 %v140, 0.70710677
    %v147 = verf.f32.pop %v145
    %v148 = verf.f32.pop %v146
    %v149 = vadd.f32 %v147, 1.0
    %v150 = vadd.f32 %v148, 1.0
    %v151 = vmul.f32 %v143, %v149
    %v152 = vmul.f32 %v144, %v150
    %153 = vst [vmem:[#allocation7] sm:$0xff] %v151
    %154 = vst [vmem:[#allocation7 + $0x8] sm:$0xff] %v152
    // Predicated region
    $region22: #{tpu_custom_call.1} parent=1 // pred_check
      _
    $region23: #{tpu_custom_call.1} parent=1 // pred_check_branch
      %156 = sbr.rel (0) target = $region25
    $region24: #{tpu_custom_call.1} parent=1 // pred_region
      %s158 = ssub.s32 256, 256
      %159 = vsyncadd [#allocation4], %s158
      %s160 = sshll.u32 [#allocation7], 4
      %s161 = int_to_ptr.vmem [resolvable:$true] %s160
      %166 = dma.vmem_to_hbm [thread:$0]  %s161, 256, %s3, [#allocation4], 128, 128, 8
    $region25: #{tpu_custom_call.1} parent=1 // pred_fallthru
      _
    // Predicated region
    $region26: #{tpu_custom_call.1} parent=1 // pred_check
      _
    $region27: #{tpu_custom_call.1} parent=1 // pred_check_branch
      %168 = sbr.rel (0) target = $region29
    $region28: #{tpu_custom_call.1} parent=1 // pred_region
      %169 = dma.done [#allocation4], 256
    $region29: #{tpu_custom_call.1} parent=1 // pred_fallthru
      _
    %170 = vsyncpa [#allocation3], 1
    %171 = vsyncpa [#allocation6], 1
    %172 = vsyncpa [#allocation4], 1

</llo_original>
